<compile_context>
chip_gen: v7x
topology: tpu7x:2x2x1
jax: 0.10.0
libtpu: 0.0.40
codegen_flags: <defaults>
</compile_context>

<pallas_src>
import jax
import jax.numpy as jnp
from jax import lax
from jax.experimental import pallas as pl
from jax.experimental.pallas import tpu as pltpu

# Synthetic environment constants (CartPole-like): obs dim 4, 2 actions.
N_STATES = 4
N_ACTIONS = 2
HIDDEN = 50


def net_kernel(x_ref, w1_ref, b1_ref, w2_ref, b2_ref, out_ref):
    # x_ref:   (TB, N_STATES)      native PyTorch layout, contiguous DMA
    # w1_ref:  (HIDDEN, N_STATES)  PyTorch (out, in) layout, VMEM-resident
    # b1_ref:  (HIDDEN, 1)         f32 column bias (broadcast over lanes)
    # w2_ref:  (N_ACTIONS, HIDDEN) VMEM-resident
    # b2_ref:  (N_ACTIONS, 1)      f32 column bias
    # out_ref: (N_ACTIONS, TB)     lane-dense output block (batch on lanes)
    x = x_ref[...]
    # h^T = W1 @ x^T: NT matmul contracting the feature dim of both operands,
    # so the 4-wide flip happens on the MXU inside the kernel instead of as a
    # separate XLA transpose round-trip through HBM.
    h = lax.dot_general(w1_ref[...], x, (((1,), (1,)), ((), ())),
                        preferred_element_type=jnp.float32)      # (HIDDEN, TB)
    h = jnp.maximum(h + b1_ref[...], 0.0)                        # bias + ReLU (VPU, f32)
    y = jnp.dot(w2_ref[...], h.astype(w2_ref.dtype),
                preferred_element_type=jnp.float32)              # (N_ACTIONS, TB)
    out_ref[...] = (y + b2_ref[...]).astype(out_ref.dtype)


def prepare_params(w1, b1, w2, b2, *, dtype=jnp.float32):
    """One-time parameter prep (call at init / target-net sync, NOT per forward).
    Weights keep the PyTorch (out, in) layout (no transpose needed); biases
    become f32 columns so they broadcast over the lane (batch) axis and add
    onto the f32 MXU accumulator.  dtype=jnp.bfloat16 halves the x HBM stream."""
    return (
        jnp.asarray(w1, dtype),                               # (HIDDEN, N_STATES)
        jnp.asarray(b1, jnp.float32).reshape(HIDDEN, 1),      # (HIDDEN, 1)
        jnp.asarray(w2, dtype),                               # (N_ACTIONS, HIDDEN)
        jnp.asarray(b2, jnp.float32).reshape(N_ACTIONS, 1),   # (N_ACTIONS, 1)
    )


def net_forward(x, params, *, tb=8192, batch_major=True):
    """x: (B, N_STATES); params: output of prepare_params().
    Returns (B, N_ACTIONS) f32 (PyTorch layout) by default; with
    batch_major=False returns the kernel-native (N_ACTIONS, B) layout."""
    assert tb % 128 == 0, "batch tile must be lane-aligned (multiple of 128)"
    w1, b1_col, w2, b2_col = params
    B = int(x.shape[0])

    # Activations in the weights' dtype (f32 default, optionally bf16).
    x_f = jnp.asarray(x, w1.dtype)

    # Batch tile on the lane axis: multiple of 128, at most `tb`, and chosen so
    # the grid has >= 2 steps whenever B allows it (both TCs on v7x).
    b_aligned = pl.cdiv(B, 128) * 128
    TB = min(tb, max(128, (b_aligned // 256) * 128))
    B_pad = pl.cdiv(B, TB) * TB
    grid = (B_pad // TB,)

    # Pad only a non-tile-aligned batch (fuses with the cast above); padded
    # rows only produce output columns that are sliced off below.
    if B_pad != B:
        x_f = jnp.pad(x_f, ((0, B_pad - B), (0, 0)))

    itemsize = jnp.dtype(w1.dtype).itemsize
    cost = pl.CostEstimate(
        flops=2 * B_pad * (N_STATES * HIDDEN + HIDDEN * N_ACTIONS),
        transcendentals=0,
        bytes_accessed=(B_pad * N_STATES * itemsize           # x stream (read)
                        + B_pad * N_ACTIONS * 4               # y stream (write)
                        + (w1.size + w2.size) * itemsize
                        + (HIDDEN + N_ACTIONS) * 4),          # biases
    )

    out_t = pl.pallas_call(
        net_kernel,
        out_shape=jax.ShapeDtypeStruct((N_ACTIONS, B_pad), jnp.float32),
        grid=grid,
        in_specs=[
            pl.BlockSpec((TB, N_STATES), lambda i: (i, 0)),        # contiguous x tile
            pl.BlockSpec((HIDDEN, N_STATES), lambda i: (0, 0)),    # W1 resident
            pl.BlockSpec((HIDDEN, 1), lambda i: (0, 0)),           # b1 resident
            pl.BlockSpec((N_ACTIONS, HIDDEN), lambda i: (0, 0)),   # W2 resident
            pl.BlockSpec((N_ACTIONS, 1), lambda i: (0, 0)),        # b2 resident
        ],
        out_specs=pl.BlockSpec((N_ACTIONS, TB), lambda i: (0, i)), # lane-dense out
        compiler_params=pltpu.CompilerParams(
            dimension_semantics=("parallel",),     # batch axis -> 2 TCs on v7x
            vmem_limit_bytes=32 * 1024 * 1024,     # covers tb up to ~16K on v5e too
        ),
        cost_estimate=cost,
    )(x_f, w1, b1_col, w2, b2_col)

    out_t = out_t[:, :B]
    # PyTorch layout only at the API boundary; action-major consumers (e.g.
    # argmax over axis 0) should pass batch_major=False and skip this.
    return out_t.T if batch_major else out_t


def init_params(key):
    """Deterministic init matching the PyTorch module's shapes.
    Weights ~ N(0, 0.1) as in __init__; biases use PyTorch's default
    Linear bias init U(-1/sqrt(fan_in), 1/sqrt(fan_in))."""
    k1, k2, k3, k4 = jax.random.split(key, 4)
    w1 = 0.1 * jax.random.normal(k1, (HIDDEN, N_STATES), jnp.float32)
    b1 = jax.random.uniform(k2, (HIDDEN,), jnp.float32,
                            -1.0 / jnp.sqrt(N_STATES), 1.0 / jnp.sqrt(N_STATES))
    w2 = 0.1 * jax.random.normal(k3, (N_ACTIONS, HIDDEN), jnp.float32)
    b2 = jax.random.uniform(k4, (N_ACTIONS,), jnp.float32,
                            -1.0 / jnp.sqrt(HIDDEN), 1.0 / jnp.sqrt(HIDDEN))
    return w1, b1, w2, b2


if __name__ == "__main__":
    key = jax.random.PRNGKey(0)
    kx, kp = jax.random.split(key)

    w1, b1, w2, b2 = init_params(kp)
    params = prepare_params(w1, b1, w2, b2)     # hoisted out of the hot path

    def ref_forward(xv):                        # plain-JAX reference of the same math
        return jnp.maximum(xv @ w1.T + b1, 0.0) @ w2.T + b2

    # Small DQN-style batch.
    x_small = jax.random.normal(kx, (2, N_STATES), jnp.float32)
    out_small = net_forward(x_small, params)
    jax.block_until_ready(out_small)
    assert out_small.shape == (2, N_ACTIONS)
    assert jnp.allclose(out_small, ref_forward(x_small), atol=1e-4, rtol=1e-4)

    # Ragged multi-step batch (exercises the pipelined grid + tail masking).
    x_med = jax.random.normal(kx, (300, N_STATES), jnp.float32)
    out_med = net_forward(x_med, params)
    jax.block_until_ready(out_med)
    assert out_med.shape == (300, N_ACTIONS)
    assert jnp.allclose(out_med, ref_forward(x_med), atol=1e-4, rtol=1e-4)

    print("KERNEL_OK")
</pallas_src>

<mosaic_0001>
module attributes {stable_mosaic.version = 11 : i64} {
  func.func @net_kernel(%arg0: i32, %arg1: memref<128x4xf32, #tpu.memory_space<vmem>>, %arg2: memref<50x4xf32, #tpu.memory_space<vmem>>, %arg3: memref<50x1xf32, #tpu.memory_space<vmem>>, %arg4: memref<2x50xf32, #tpu.memory_space<vmem>>, %arg5: memref<2x1xf32, #tpu.memory_space<vmem>>, %arg6: memref<2x128xf32, #tpu.memory_space<vmem>>) attributes {dimension_semantics = [#tpu.dimension_semantics<parallel>], iteration_bounds = array<i64: 1>, scalar_prefetch = 0 : i64, scratch_operands = 0 : i64, tpu.core_type = #tpu.core_type<tc>, window_params = [{transform_indices = @transform_0, window_bounds = array<i64: 128, 4>}, {pipeline_mode = #tpu.pipeline_mode<synchronous>, transform_indices = @transform_1, window_bounds = array<i64: 50, 4>}, {pipeline_mode = #tpu.pipeline_mode<synchronous>, transform_indices = @transform_2, window_bounds = array<i64: 50, 1>}, {pipeline_mode = #tpu.pipeline_mode<synchronous>, transform_indices = @transform_3, window_bounds = array<i64: 2, 50>}, {pipeline_mode = #tpu.pipeline_mode<synchronous>, transform_indices = @transform_4, window_bounds = array<i64: 2, 1>}, {transform_indices = @transform_5, window_bounds = array<i64: 2, 128>}]} {
    %c0 = arith.constant 0 : index
    %c0_0 = arith.constant 0 : index
    %0 = vector.load %arg1[%c0, %c0_0] : memref<128x4xf32, #tpu.memory_space<vmem>>, vector<128x4xf32>
    %c0_1 = arith.constant 0 : index
    %c0_2 = arith.constant 0 : index
    %1 = vector.load %arg2[%c0_1, %c0_2] : memref<50x4xf32, #tpu.memory_space<vmem>>, vector<50x4xf32>
    %cst = arith.constant dense<0.000000e+00> : vector<50x128xf32>
    %2 = tpu.matmul %1, %0, %cst {dimension_numbers = #tpu.dot_dimension_numbers<[1], [1], [0], [0], [0, 0, 1, 0], [], []>} : vector<50x4xf32>, vector<128x4xf32>, vector<50x128xf32> -> vector<50x128xf32>
    %c0_3 = arith.constant 0 : index
    %c0_4 = arith.constant 0 : index
    %3 = vector.load %arg3[%c0_3, %c0_4] : memref<50x1xf32, #tpu.memory_space<vmem>>, vector<50x1xf32>
    %4 = vector.broadcast %3 : vector<50x1xf32> to vector<50x128xf32>
    %5 = arith.addf %2, %4 : vector<50x128xf32>
    %cst_5 = arith.constant 0.000000e+00 : f32
    %6 = vector.broadcast %cst_5 : f32 to vector<50x128xf32>
    %7 = arith.maximumf %5, %6 : vector<50x128xf32>
    %c0_6 = arith.constant 0 : index
    %c0_7 = arith.constant 0 : index
    %8 = vector.load %arg4[%c0_6, %c0_7] : memref<2x50xf32, #tpu.memory_space<vmem>>, vector<2x50xf32>
    %cst_8 = arith.constant dense<0.000000e+00> : vector<2x128xf32>
    %9 = tpu.matmul %8, %7, %cst_8 {dimension_numbers = #tpu.dot_dimension_numbers<[1], [0], [0], [1], [0, 0, 1, 1], [], []>} : vector<2x50xf32>, vector<50x128xf32>, vector<2x128xf32> -> vector<2x128xf32>
    %c0_9 = arith.constant 0 : index
    %c0_10 = arith.constant 0 : index
    %10 = vector.load %arg5[%c0_9, %c0_10] : memref<2x1xf32, #tpu.memory_space<vmem>>, vector<2x1xf32>
    %11 = vector.broadcast %10 : vector<2x1xf32> to vector<2x128xf32>
    %12 = arith.addf %9, %11 : vector<2x128xf32>
    %c0_11 = arith.constant 0 : index
    %c0_12 = arith.constant 0 : index
    %13 = vector.load %arg6[%c0_11, %c0_12] : memref<2x128xf32, #tpu.memory_space<vmem>>, vector<2x128xf32>
    tpu.vector_store %arg6[%c0_11, %c0_12], %12 {strides = array<i32>} : memref<2x128xf32, #tpu.memory_space<vmem>>, vector<2x128xf32>,
    return
  }
  func.func @transform_0(%arg0: i32) -> (i32, i32) {
    %c0_i32 = arith.constant 0 : i32
    %c0_i32_0 = arith.constant 0 : i32
    return %arg0, %c0_i32 : i32, i32
  }
  func.func @transform_1(%arg0: i32) -> (i32, i32) {
    %c0_i32 = arith.constant 0 : i32
    %c0_i32_0 = arith.constant 0 : i32
    %c0_i32_1 = arith.constant 0 : i32
    return %c0_i32, %c0_i32_0 : i32, i32
  }
  func.func @transform_2(%arg0: i32) -> (i32, i32) {
    %c0_i32 = arith.constant 0 : i32
    %c0_i32_0 = arith.constant 0 : i32
    %c0_i32_1 = arith.constant 0 : i32
    return %c0_i32, %c0_i32_0 : i32, i32
  }
  func.func @transform_3(%arg0: i32) -> (i32, i32) {
    %c0_i32 = arith.constant 0 : i32
    %c0_i32_0 = arith.constant 0 : i32
    %c0_i32_1 = arith.constant 0 : i32
    return %c0_i32, %c0_i32_0 : i32, i32
  }
  func.func @transform_4(%arg0: i32) -> (i32, i32) {
    %c0_i32 = arith.constant 0 : i32
    %c0_i32_0 = arith.constant 0 : i32
    %c0_i32_1 = arith.constant 0 : i32
    return %c0_i32, %c0_i32_0 : i32, i32
  }
  func.func @transform_5(%arg0: i32) -> (i32, i32) {
    %c0_i32 = arith.constant 0 : i32
    %c0_i32_0 = arith.constant 0 : i32
    return %c0_i32, %arg0 : i32, i32
  }
}

</mosaic_0001>

<llo_original>
// kernel: tpu_custom_call.1
$region0: #{tpu_custom_call.1}
  #allocation0 [shape = 'u32[]', space=smem, size = 0x4, offset = 0x4, fixed_abs, tag = 'smem constant byte address 0x4 - core index']
  #allocation1 [shape = 'u32[144,128]{1,0:T(1,128)}', space=vmem, size = 0x12000, scoped, tag = 'internal scratch']
  %s0 = inlined_call_operand.vmem [shape: f32[128,4], index: 0, kind: input, shape index: {}]
  %s1 = inlined_call_operand.vmem [shape: f32[50,4], index: 1, kind: input, shape index: {}]
  %s2 = inlined_call_operand.vmem [shape: f32[50,1], index: 2, kind: input, shape index: {}]
  %s3 = inlined_call_operand.vmem [shape: f32[2,50], index: 3, kind: input, shape index: {}]
  %s4 = inlined_call_operand.vmem [shape: f32[2,1], index: 4, kind: input, shape index: {}]
  %s5 = inlined_call_operand.hbm [shape: f32[2,128], index: 5, kind: output, shape index: {}]
  %s6 = sld [smem:[#allocation0]]
  $region30: #{tpu_custom_call.1} parent=0
    _
  %s8 = ssub.s32 1, %s6
  %s9 = scalar_select 0, %s8, %s6
  $region1: #{tpu_custom_call.1} parent=0
    #allocation2 [shape = 'u8[1024]{0}', space=vmem, size = 0x400, scoped, tag = 'output window, operand 0, single buffered']
    #allocation3 [shape = 's32[1]{0}', space=sflag, size = 0x4, scoped, tag = 'scoped memory for tpu_custom_call.1']
    %10 = vsyncpa [#allocation3], 0
    // Predicated region
    $region2: #{tpu_custom_call.1} parent=1 // pred_check
      _
    $region3: #{tpu_custom_call.1} parent=1 // pred_check_branch
      %12 = sbr.rel (0) target = $region5
    $region4: #{tpu_custom_call.1} parent=1 // pred_region
      _
    $region5: #{tpu_custom_call.1} parent=1 // pred_fallthru
      _
    // Predicated region
    $region6: #{tpu_custom_call.1} parent=1 // pred_check
      _
    $region7: #{tpu_custom_call.1} parent=1 // pred_check_branch
      %14 = sbr.rel (0) target = $region9
    $region8: #{tpu_custom_call.1} parent=1 // pred_region
      _
    $region9: #{tpu_custom_call.1} parent=1 // pred_fallthru
      _
    // Predicated region
    $region10: #{tpu_custom_call.1} parent=1 // pred_check
      _
    $region11: #{tpu_custom_call.1} parent=1 // pred_check_branch
      %16 = sbr.rel (0) target = $region13
    $region12: #{tpu_custom_call.1} parent=1 // pred_region
      _
    $region13: #{tpu_custom_call.1} parent=1 // pred_fallthru
      _
    // Predicated region
    $region14: #{tpu_custom_call.1} parent=1 // pred_check
      _
    $region15: #{tpu_custom_call.1} parent=1 // pred_check_branch
      %18 = sbr.rel (0) target = $region17
    $region16: #{tpu_custom_call.1} parent=1 // pred_region
      _
    $region17: #{tpu_custom_call.1} parent=1 // pred_fallthru
      _
    // Predicated region
    $region18: #{tpu_custom_call.1} parent=1 // pred_check
      _
    $region19: #{tpu_custom_call.1} parent=1 // pred_check_branch
      %20 = sbr.rel (0) target = $region21
    $region20: #{tpu_custom_call.1} parent=1 // pred_region
      _
    $region21: #{tpu_custom_call.1} parent=1 // pred_fallthru
      _
    %v21 = vld [vmem:[%s0] sm:$0xff]
    %v22 = vld [vmem:[%s0 + $0x8] sm:$0xff]
    %v23 = vld [vmem:[%s0 + $0x10] sm:$0xff]
    %v24 = vld [vmem:[%s0 + $0x18] sm:$0xff]
    %v25 = vld [vmem:[%s0 + $0x20] sm:$0xff]
    %v26 = vld [vmem:[%s0 + $0x28] sm:$0xff]
    %v27 = vld [vmem:[%s0 + $0x30] sm:$0xff]
    %v28 = vld [vmem:[%s0 + $0x38] sm:$0xff]
    %v29 = vld [vmem:[%s0 + $0x40] sm:$0xff]
    %v30 = vld [vmem:[%s0 + $0x48] sm:$0xff]
    %v31 = vld [vmem:[%s0 + $0x50] sm:$0xff]
    %v32 = vld [vmem:[%s0 + $0x58] sm:$0xff]
    %v33 = vld [vmem:[%s0 + $0x60] sm:$0xff]
    %v34 = vld [vmem:[%s0 + $0x68] sm:$0xff]
    %v35 = vld [vmem:[%s0 + $0x70] sm:$0xff]
    %v36 = vld [vmem:[%s0 + $0x78] sm:$0xff]
    %v37 = vld [vmem:[%s1] sm:$0xff]
    %v38 = vld [vmem:[%s1 + $0x8] sm:$0xff]
    %v39 = vld [vmem:[%s1 + $0x10] sm:$0xff]
    %v40 = vld [vmem:[%s1 + $0x18] sm:$0xff]
    %v41 = vld [vmem:[%s1 + $0x20] sm:$0xff]
    %v42 = vld [vmem:[%s1 + $0x28] sm:$0xff]
    %v43 = vld [vmem:[%s1 + $0x30] sm:$0x3]
    %v44 = vld [vmem:[%s2] sm:$0xff]
    %v45 = vld [vmem:[%s2 + $0x8] sm:$0xff]
    %v46 = vld [vmem:[%s2 + $0x10] sm:$0xff]
    %v47 = vld [vmem:[%s2 + $0x18] sm:$0xff]
    %v48 = vld [vmem:[%s2 + $0x20] sm:$0xff]
    %v49 = vld [vmem:[%s2 + $0x28] sm:$0xff]
    %v50 = vld [vmem:[%s2 + $0x30] sm:$0x3]
    %52 = vset.pattern.permute.xlu0 0
    %53 = vperm.xlu0 %52, %v44
    %v54 = vpop.permute.xlu0 %53
    %57 = vset.pattern.permute.xlu0 0
    %58 = vperm.xlu0 %57, %v45
    %v59 = vpop.permute.xlu0 %58
    %62 = vset.pattern.permute.xlu0 0
    %63 = vperm.xlu0 %62, %v46
    %v64 = vpop.permute.xlu0 %63
    %67 = vset.pattern.permute.xlu0 0
    %68 = vperm.xlu0 %67, %v47
    %v69 = vpop.permute.xlu0 %68
    %72 = vset.pattern.permute.xlu0 0
    %73 = vperm.xlu0 %72, %v48
    %v74 = vpop.permute.xlu0 %73
    %77 = vset.pattern.permute.xlu0 0
    %78 = vperm.xlu0 %77, %v49
    %v79 = vpop.permute.xlu0 %78
    %82 = vset.pattern.permute.xlu0 0
    %83 = vperm.xlu0 %82, %v50
    %v84 = vpop.permute.xlu0 %83
    %vm86 = vcmask 31744
    %v88 = vsel %vm86, %v37, 0
    %v91 = vsel %vm86, %v38, 0
    %v94 = vsel %vm86, %v39, 0
    %v97 = vsel %vm86, %v40, 0
    %v100 = vsel %vm86, %v41, 0
    %v103 = vsel %vm86, %v42, 0
    %v106 = vsel %vm86, %v43, 0
    %v109 = vsel %vm86, %v21, 0
    %v112 = vsel %vm86, %v22, 0
    %v115 = vsel %vm86, %v23, 0
    %v118 = vsel %vm86, %v24, 0
    %v121 = vsel %vm86, %v25, 0
    %v124 = vsel %vm86, %v26, 0
    %v127 = vsel %vm86, %v27, 0
    %v130 = vsel %vm86, %v28, 0
    %v133 = vsel %vm86, %v29, 0
    %v136 = vsel %vm86, %v30, 0
    %v139 = vsel %vm86, %v31, 0
    %v142 = vsel %vm86, %v32, 0
    %v145 = vsel %vm86, %v33, 0
    %v148 = vsel %vm86, %v34, 0
    %v151 = vsel %vm86, %v35, 0
    %v154 = vsel %vm86, %v36, 0
    %156 = vmatprep.subr.mxu0 0.0
    %157 = vmatpush1.xpose.msra.mxu0 %v109
    %158 = vmatprep.subr.mxu0 0.0
    %159 = vmatpush1.xpose.msra.mxu0 %v112
    %160 = vmatprep.subr.mxu0 0.0
    %161 = vmatpush1.xpose.msra.mxu0 %v115
    %162 = vmatprep.subr.mxu0 0.0
    %163 = vmatpush1.xpose.msra.mxu0 %v118
    %164 = vmatprep.subr.mxu0 0.0
    %165 = vmatpush1.xpose.msra.mxu0 %v121
    %166 = vmatprep.subr.mxu0 0.0
    %167 = vmatpush1.xpose.msra.mxu0 %v124
    %168 = vmatprep.subr.mxu0 0.0
    %169 = vmatpush1.xpose.msra.mxu0 %v127
    %170 = vmatprep.subr.mxu0 0.0
    %171 = vmatpush1.xpose.msra.mxu0 %v130
    %172 = vmatprep.subr.mxu0 0.0
    %173 = vmatpush1.xpose.msra.mxu0 %v133
    %174 = vmatprep.subr.mxu0 0.0
    %175 = vmatpush1.xpose.msra.mxu0 %v136
    %176 = vmatprep.subr.mxu0 0.0
    %177 = vmatpush1.xpose.msra.mxu0 %v139
    %178 = vmatprep.subr.mxu0 0.0
    %179 = vmatpush1.xpose.msra.mxu0 %v142
    %180 = vmatprep.subr.mxu0 0.0
    %181 = vmatpush1.xpose.msra.mxu0 %v145
    %182 = vmatprep.subr.mxu0 0.0
    %183 = vmatpush1.xpose.msra.mxu0 %v148
    %184 = vmatprep.subr.mxu0 0.0
    %185 = vmatpush1.xpose.msra.mxu0 %v151
    %186 = vmatprep.subr.mxu0 0.0
    %187 = vmatpush1.xpose.msra.mxu0 %v154
    %188 = vmatprep.subr.mxu0 0.0
    %189 = vmatpush1.xpose.msra.mxu0 0.0
    %190 = vmatprep.subr.mxu0 0.0
    %191 = vmatpush1.xpose.msra.mxu0 0.0
    %192 = vmatprep.subr.mxu0 0.0
    %193 = vmatpush1.xpose.msra.mxu0 0.0
    %194 = vmatprep.subr.mxu0 0.0
    %195 = vmatpush1.xpose.msra.mxu0 0.0
    %196 = vmatprep.subr.mxu0 0.0
    %197 = vmatpush1.xpose.msra.mxu0 0.0
    %198 = vmatprep.subr.mxu0 0.0
    %199 = vmatpush1.xpose.msra.mxu0 0.0
    %200 = vmatprep.subr.mxu0 0.0
    %201 = vmatpush1.xpose.msra.mxu0 0.0
    %202 = vmatprep.subr.mxu0 0.0
    %203 = vmatpush1.xpose.msra.mxu0 0.0
    %204 = vmatprep.subr.mxu0 0.0
    %205 = vmatpush1.xpose.msra.mxu0 0.0
    %206 = vmatprep.subr.mxu0 0.0
    %207 = vmatpush1.xpose.msra.mxu0 0.0
    %208 = vmatprep.subr.mxu0 0.0
    %209 = vmatpush1.xpose.msra.mxu0 0.0
    %210 = vmatprep.subr.mxu0 0.0
    %211 = vmatpush1.xpose.msra.mxu0 0.0
    %212 = vmatprep.subr.mxu0 0.0
    %213 = vmatpush1.xpose.msra.mxu0 0.0
    %214 = vmatprep.subr.mxu0 0.0
    %215 = vmatpush1.xpose.msra.mxu0 0.0
    %216 = vmatprep.subr.mxu0 0.0
    %217 = vmatpush1.xpose.msra.mxu0 0.0
    %218 = vmatprep.subr.mxu0 0.0
    %219 = vmatpush1.xpose.msra.mxu0 0.0
    %220 = vmatprep.mubr.f32.mxu0 0.0
    %221 = vmatmul.mubr.f32.gmra.mrb[0].mxu0 %v88
    %v222 = vpop.f32.mrb[0].mxu0
    %v223 = vadd.f32 %v54, %v222
    %v224 = vpop.f32.mrb[0].mxu0
    %225 = vmatprep.mubr.f32.mxu0 0.0
    %226 = vmatmul.mubr.f32.gmra.mrb[0].mxu0 %v91
    %v227 = vpop.f32.mrb[0].mxu0
    %v228 = vadd.f32 %v59, %v227
    %v229 = vpop.f32.mrb[0].mxu0
    %230 = vmatprep.mubr.f32.mxu0 0.0
    %231 = vmatmul.mubr.f32.gmra.mrb[0].mxu0 %v94
    %v232 = vpop.f32.mrb[0].mxu0
    %v233 = vadd.f32 %v64, %v232
    %v234 = vpop.f32.mrb[0].mxu0
    %235 = vmatprep.mubr.f32.mxu0 0.0
    %236 = vmatmul.mubr.f32.gmra.mrb[0].mxu0 %v97
    %v237 = vpop.f32.mrb[0].mxu0
    %v238 = vadd.f32 %v69, %v237
    %v239 = vpop.f32.mrb[0].mxu0
    %240 = vmatprep.mubr.f32.mxu0 0.0
    %241 = vmatmul.mubr.f32.gmra.mrb[0].mxu0 %v100
    %v242 = vpop.f32.mrb[0].mxu0
    %v243 = vadd.f32 %v74, %v242
    %v244 = vpop.f32.mrb[0].mxu0
    %245 = vmatprep.mubr.f32.mxu0 0.0
    %246 = vmatmul.mubr.f32.gmra.mrb[0].mxu0 %v103
    %v247 = vpop.f32.mrb[0].mxu0
    %v248 = vadd.f32 %v79, %v247
    %v249 = vpop.f32.mrb[0].mxu0
    %250 = vmatprep.mubr.f32.mxu0 0.0
    %251 = vmatmul.mubr.f32.gmra.mrb[0].mxu0 %v106
    %v252 = vpop.f32.mrb[0].mxu0
    %v253 = vadd.f32 %v84, %v252
    %v254 = vpop.f32.mrb[0].mxu0
    %255 = vdwg.mxu0
    %v256 = vmax.f32 %v223, 0.0
    %v257 = vmax.f32 %v228, 0.0
    %v258 = vmax.f32 %v233, 0.0
    %v259 = vmax.f32 %v238, 0.0
    %v260 = vmax.f32 %v243, 0.0
    %v261 = vmax.f32 %v248, 0.0
    %v262 = vmax.f32 %v253, 0.0
    %v263 = vld [vmem:[%s3] sm:$0x3]
    %v264 = vld [vmem:[%s4] sm:$0x3]
    %266 = vset.pattern.permute.xlu0 0
    %267 = vperm.xlu0 %266, %v264
    %v268 = vpop.permute.xlu0 %267
    %vm270 = vcmask 408576
    %v272 = vsel %vm270, %v263, 0
    %vm274 = vcmask 1041408
    %v276 = vsel %vm274, %v262, 0
    %278 = vmatprep.subr.mxu0 0.0
    %279 = vmatpush1.msra.mxu0 %v256
    %280 = vmatprep.subr.mxu0 0.0
    %281 = vmatpush1.msra.mxu0 %v257
    %282 = vmatprep.subr.mxu0 0.0
    %283 = vmatpush1.msra.mxu0 %v258
    %284 = vmatprep.subr.mxu0 0.0
    %285 = vmatpush1.msra.mxu0 %v259
    %286 = vmatprep.subr.mxu0 0.0
    %287 = vmatpush1.msra.mxu0 %v260
    %288 = vmatprep.subr.mxu0 0.0
    %289 = vmatpush1.msra.mxu0 %v261
    %290 = vmatprep.subr.mxu0 0.0
    %291 = vmatpush1.msra.mxu0 %v276
    %292 = vmatprep.subr.mxu0 0.0
    %293 = vmatpush1.msra.mxu0 0.0
    %294 = vmatprep.subr.mxu0 0.0
    %295 = vmatpush1.msra.mxu0 0.0
    %296 = vmatprep.subr.mxu0 0.0
    %297 = vmatpush1.msra.mxu0 0.0
    %298 = vmatprep.subr.mxu0 0.0
    %299 = vmatpush1.msra.mxu0 0.0
    %300 = vmatprep.subr.mxu0 0.0
    %301 = vmatpush1.msra.mxu0 0.0
    %302 = vmatprep.subr.mxu0 0.0
    %303 = vmatpush1.msra.mxu0 0.0
    %304 = vmatprep.subr.mxu0 0.0
    %305 = vmatpush1.msra.mxu0 0.0
    %306 = vmatprep.subr.mxu0 0.0
    %307 = vmatpush1.msra.mxu0 0.0
    %308 = vmatprep.subr.mxu0 0.0
    %309 = vmatpush1.msra.mxu0 0.0
    %310 = vmatprep.subr.mxu0 0.0
    %311 = vmatpush1.msra.mxu0 0.0
    %312 = vmatprep.subr.mxu0 0.0
    %313 = vmatpush1.msra.mxu0 0.0
    %314 = vmatprep.subr.mxu0 0.0
    %315 = vmatpush1.msra.mxu0 0.0
    %316 = vmatprep.subr.mxu0 0.0
    %317 = vmatpush1.msra.mxu0 0.0
    %318 = vmatprep.subr.mxu0 0.0
    %319 = vmatpush1.msra.mxu0 0.0
    %320 = vmatprep.subr.mxu0 0.0
    %321 = vmatpush1.msra.mxu0 0.0
    %322 = vmatprep.subr.mxu0 0.0
    %323 = vmatpush1.msra.mxu0 0.0
    %324 = vmatprep.subr.mxu0 0.0
    %325 = vmatpush1.msra.mxu0 0.0
    %326 = vmatprep.subr.mxu0 0.0
    %327 = vmatpush1.msra.mxu0 0.0
    %328 = vmatprep.subr.mxu0 0.0
    %329 = vmatpush1.msra.mxu0 0.0
    %330 = vmatprep.subr.mxu0 0.0
    %331 = vmatpush1.msra.mxu0 0.0
    %332 = vmatprep.subr.mxu0 0.0
    %333 = vmatpush1.msra.mxu0 0.0
    %334 = vmatprep.subr.mxu0 0.0
    %335 = vmatpush1.msra.mxu0 0.0
    %336 = vmatprep.subr.mxu0 0.0
    %337 = vmatpush1.msra.mxu0 0.0
    %338 = vmatprep.subr.mxu0 0.0
    %339 = vmatpush1.msra.mxu0 0.0
    %340 = vmatprep.subr.mxu0 0.0
    %341 = vmatpush1.msra.mxu0 0.0
    %342 = vmatprep.mubr.f32.mxu0 0.0
    %343 = vmatmul.mubr.f32.gmra.mrb[0].mxu0 %v272
    %v344 = vpop.f32.mrb[0].mxu0
    %v345 = vadd.f32 %v268, %v344
    %v346 = vpop.f32.mrb[0].mxu0
    %347 = vdwg.mxu0
    %348 = vst [vmem:[#allocation2] sm:$0x3] %v345
    // Predicated region
    $region22: #{tpu_custom_call.1} parent=1 // pred_check
      _
    $region23: #{tpu_custom_call.1} parent=1 // pred_check_branch
      %350 = sbr.rel (0) target = $region25
    $region24: #{tpu_custom_call.1} parent=1 // pred_region
      %s352 = ssub.s32 32, 32
      %353 = vsyncadd [#allocation3], %s352
      %s355 = sshll.u32 [#allocation2], 4
      %s356 = int_to_ptr.vmem [resolvable:$true] %s355
      %358 = dma.vmem_to_hbm [thread:$0]  %s356, 32, %s5, [#allocation3]
    $region25: #{tpu_custom_call.1} parent=1 // pred_fallthru
      _
    // Predicated region
    $region26: #{tpu_custom_call.1} parent=1 // pred_check
      _
    $region27: #{tpu_custom_call.1} parent=1 // pred_check_branch
      %360 = sbr.rel (0) target = $region29
    $region28: #{tpu_custom_call.1} parent=1 // pred_region
      %361 = dma.done [#allocation3], 32
    $region29: #{tpu_custom_call.1} parent=1 // pred_fallthru
      _
    %362 = vsyncpa [#allocation3], 1

</llo_original>
